<compile_context>
chip_gen: v5e
topology: v5e:2x2
jax: 0.10.0
libtpu: 0.0.40
codegen_flags: <defaults>
</compile_context>

<pallas_src>
import functools

import jax
import jax.numpy as jnp
from jax.experimental import pallas as pl
from jax.experimental.pallas import tpu as pltpu

SUBLANE = 8                 # batch tile must be a multiple of the 8-row sublane
DEFAULT_BLOCK_BATCH = 1024  # large tile amortizes per-grid-step overhead


def _round_up(x, m):
    return (x + m - 1) // m * m


def _fused_mlp_kernel(*refs, n_layers):
    # refs = (x_ref, w1_ref, b1_ref, ..., wN_ref, bN_ref, out_ref)
    x_ref, out_ref = refs[0], refs[-1]
    wb = refs[1:-1]

    h = x_ref[...]                                    # (tb, Din) f32
    for idx in range(n_layers):
        w_ref = wb[2 * idx]                           # (Din_l, Dout_l), VMEM-resident
        b_ref = wb[2 * idx + 1]                       # (1, Dout_l), VMEM-resident
        h = jnp.dot(h, w_ref[...], preferred_element_type=jnp.float32)
        h = h + b_ref[...]                            # broadcast over batch tile
        if idx != n_layers - 1:
            h = jnp.maximum(h, 0.0)                   # ReLU between layers only
    out_ref[...] = h.astype(out_ref.dtype)


def qnet_forward(params, x, *, block_batch=None):
    """Fused QNet forward: one pallas_call, batch-tiled, weights VMEM-resident.

    params: list of (W, b) with W shaped (in_d, out_d) and b shaped (1, out_d)
            (or (out_d,)).  No padding of any array is required or performed.
    """
    B, Din = x.shape
    n_layers = len(params)
    dims = [Din] + [w.shape[1] for (w, _) in params]
    Dout = dims[-1]
    assert params[0][0].shape[0] == Din, "x feature dim must match first layer"

    # --- batch tiling -------------------------------------------------------
    if block_batch is None:
        # Big tile for per-step-overhead amortization, but capped so that the
        # "parallel" batch axis produces >= 2 grid steps (v7x has 2 TCs).
        tb = min(DEFAULT_BLOCK_BATCH, _round_up(pl.cdiv(B, 2), SUBLANE))
    else:
        tb = _round_up(block_batch, SUBLANE)
    tb = max(SUBLANE, min(tb, _round_up(B, SUBLANE)))
    grid = (pl.cdiv(B, tb),)

    # --- inputs / BlockSpecs (everything at natural, unpadded shapes) -------
    flat_inputs = [x]
    # Last block dim == full array dim (Din), so this is legal even for Din<128.
    in_specs = [pl.BlockSpec((tb, Din), lambda i: (i, 0))]
    for (w, b) in params:
        b2 = b if b.ndim == 2 else b.reshape(1, -1)
        flat_inputs += [w, b2]
        in_specs += [
            # Full-array blocks, constant index_map -> resident across the grid.
            # (If hidden dims ever grow large, pipeline_mode=pl.Buffered(1)
            #  would reclaim the second resident copy; at these sizes the
            #  double-buffered copies are a few KiB and irrelevant.)
            pl.BlockSpec(w.shape, lambda i: (0, 0)),
            pl.BlockSpec(b2.shape, lambda i: (0, 0)),
        ]

    # --- explicit VMEM budget (safe on v5e 16 MiB scoped .. v7x 64 MiB) -----
    itemsize = x.dtype.itemsize
    param_bytes = sum(w.size * w.dtype.itemsize + b.size * b.dtype.itemsize
                      for (w, b) in params)
    io_bytes = 2 * tb * Din * itemsize + 2 * tb * Dout * itemsize  # dbl-buffered tiles
    act_bytes = 4 * tb * max(dims) * 4                             # live f32 intermediates
    vmem_est = 2 * param_bytes + io_bytes + act_bytes
    vmem_limit = int(min(max(2 * vmem_est, 4 << 20), 48 << 20))

    kernel = functools.partial(_fused_mlp_kernel, n_layers=n_layers)
    return pl.pallas_call(
        kernel,
        out_shape=jax.ShapeDtypeStruct((B, Dout), x.dtype),
        grid=grid,
        in_specs=in_specs,
        out_specs=pl.BlockSpec((tb, Dout), lambda i: (i, 0)),
        compiler_params=pltpu.CompilerParams(
            dimension_semantics=("parallel",),   # megacore-shardable batch axis
            vmem_limit_bytes=vmem_limit,
        ),
    )(*flat_inputs)


def init_qnet_params(key, state_dim, hidden_dims, act_dim):
    """Deterministic init matching QNet's layer shapes.

    Weights stored (in, out) (transpose of torch's (out, in)); biases stored
    (1, out) so no per-call reshape is needed.
    """
    input_dims = [state_dim] + list(hidden_dims)
    output_dims = list(hidden_dims) + [act_dim]
    params = []
    for in_d, out_d in zip(input_dims, output_dims):
        key, kw, kb = jax.random.split(key, 3)
        bound = 1.0 / (in_d ** 0.5)
        w = jax.random.uniform(kw, (in_d, out_d), jnp.float32, -bound, bound)
        b = jax.random.uniform(kb, (1, out_d), jnp.float32, -bound, bound)
        params.append((w, b))
    return params


def qnet_forward_ref(params, x):
    """Pure-JAX reference for correctness checking."""
    n_layers = len(params)
    h = x
    for idx, (w, b) in enumerate(params):
        h = h @ w + b.reshape(1, -1)
        if idx != n_layers - 1:
            h = jnp.maximum(h, 0.0)
    return h


if __name__ == "__main__":
    # Small shapes consistent with the module: state_dim=16, hidden=[32,32], act_dim=8
    batch = 8
    state_dim = 16
    hidden_dims = [32, 32]
    act_dim = 8

    key = jax.random.PRNGKey(0)
    key_params, key_x, key_x2, key_x3 = jax.random.split(key, 4)
    params = init_qnet_params(key_params, state_dim, hidden_dims, act_dim)

    # Single-tile path.
    x = jax.random.normal(key_x, (batch, state_dim), jnp.float32)
    out = jax.block_until_ready(qnet_forward(params, x))
    ref = qnet_forward_ref(params, x)
    assert out.shape == (batch, act_dim)
    assert jnp.allclose(out, ref, atol=1e-5, rtol=1e-5), "mismatch vs reference"

    # Multi-step (grid > 1) path.
    x2 = jax.random.normal(key_x2, (64, state_dim), jnp.float32)
    out2 = jax.block_until_ready(qnet_forward(params, x2, block_batch=16))
    ref2 = qnet_forward_ref(params, x2)
    assert out2.shape == (64, act_dim)
    assert jnp.allclose(out2, ref2, atol=1e-5, rtol=1e-5), "mismatch vs reference (tiled)"

    # Ragged batch -> partial last block (garbage rows only feed dropped outputs).
    x3 = jax.random.normal(key_x3, (50, state_dim), jnp.float32)
    out3 = jax.block_until_ready(qnet_forward(params, x3, block_batch=16))
    ref3 = qnet_forward_ref(params, x3)
    assert out3.shape == (50, act_dim)
    assert jnp.allclose(out3, ref3, atol=1e-5, rtol=1e-5), "mismatch vs reference (ragged)"

    print("KERNEL_OK")
</pallas_src>

<mosaic_0001>
module attributes {stable_mosaic.version = 11 : i64} {
  func.func @_fused_mlp_kernel(%arg0: i32, %arg1: memref<8x16xf32, #tpu.memory_space<vmem>>, %arg2: memref<16x32xf32, #tpu.memory_space<vmem>>, %arg3: memref<1x32xf32, #tpu.memory_space<vmem>>, %arg4: memref<32x32xf32, #tpu.memory_space<vmem>>, %arg5: memref<1x32xf32, #tpu.memory_space<vmem>>, %arg6: memref<32x8xf32, #tpu.memory_space<vmem>>, %arg7: memref<1x8xf32, #tpu.memory_space<vmem>>, %arg8: memref<8x8xf32, #tpu.memory_space<vmem>>) attributes {dimension_semantics = [#tpu.dimension_semantics<parallel>], iteration_bounds = array<i64: 1>, scalar_prefetch = 0 : i64, scratch_operands = 0 : i64, tpu.core_type = #tpu.core_type<tc>, window_params = [{transform_indices = @transform_0, window_bounds = array<i64: 8, 16>}, {pipeline_mode = #tpu.pipeline_mode<synchronous>, transform_indices = @transform_1, window_bounds = array<i64: 16, 32>}, {pipeline_mode = #tpu.pipeline_mode<synchronous>, transform_indices = @transform_2, window_bounds = array<i64: 1, 32>}, {pipeline_mode = #tpu.pipeline_mode<synchronous>, transform_indices = @transform_3, window_bounds = array<i64: 32, 32>}, {pipeline_mode = #tpu.pipeline_mode<synchronous>, transform_indices = @transform_4, window_bounds = array<i64: 1, 32>}, {pipeline_mode = #tpu.pipeline_mode<synchronous>, transform_indices = @transform_5, window_bounds = array<i64: 32, 8>}, {pipeline_mode = #tpu.pipeline_mode<synchronous>, transform_indices = @transform_6, window_bounds = array<i64: 1, 8>}, {transform_indices = @transform_7, window_bounds = array<i64: 8, 8>}]} {
    %c0 = arith.constant 0 : index
    %c0_0 = arith.constant 0 : index
    %0 = vector.load %arg1[%c0, %c0_0] : memref<8x16xf32, #tpu.memory_space<vmem>>, vector<8x16xf32>
    %c0_1 = arith.constant 0 : index
    %c0_2 = arith.constant 0 : index
    %1 = vector.load %arg2[%c0_1, %c0_2] : memref<16x32xf32, #tpu.memory_space<vmem>>, vector<16x32xf32>
    %cst = arith.constant dense<0.000000e+00> : vector<8x32xf32>
    %2 = tpu.matmul %0, %1, %cst {dimension_numbers = #tpu.dot_dimension_numbers<[1], [0], [0], [1], [0, 0, 1, 1], [], []>} : vector<8x16xf32>, vector<16x32xf32>, vector<8x32xf32> -> vector<8x32xf32>
    %c0_3 = arith.constant 0 : index
    %c0_4 = arith.constant 0 : index
    %3 = vector.load %arg3[%c0_3, %c0_4] : memref<1x32xf32, #tpu.memory_space<vmem>>, vector<1x32xf32>
    %4 = vector.broadcast %3 : vector<1x32xf32> to vector<8x32xf32>
    %5 = arith.addf %2, %4 : vector<8x32xf32>
    %cst_5 = arith.constant 0.000000e+00 : f32
    %6 = vector.broadcast %cst_5 : f32 to vector<8x32xf32>
    %7 = arith.maximumf %5, %6 : vector<8x32xf32>
    %c0_6 = arith.constant 0 : index
    %c0_7 = arith.constant 0 : index
    %8 = vector.load %arg4[%c0_6, %c0_7] : memref<32x32xf32, #tpu.memory_space<vmem>>, vector<32x32xf32>
    %cst_8 = arith.constant dense<0.000000e+00> : vector<8x32xf32>
    %9 = tpu.matmul %7, %8, %cst_8 {dimension_numbers = #tpu.dot_dimension_numbers<[1], [0], [0], [1], [0, 0, 1, 1], [], []>} : vector<8x32xf32>, vector<32x32xf32>, vector<8x32xf32> -> vector<8x32xf32>
    %c0_9 = arith.constant 0 : index
    %c0_10 = arith.constant 0 : index
    %10 = vector.load %arg5[%c0_9, %c0_10] : memref<1x32xf32, #tpu.memory_space<vmem>>, vector<1x32xf32>
    %11 = vector.broadcast %10 : vector<1x32xf32> to vector<8x32xf32>
    %12 = arith.addf %9, %11 : vector<8x32xf32>
    %cst_11 = arith.constant 0.000000e+00 : f32
    %13 = vector.broadcast %cst_11 : f32 to vector<8x32xf32>
    %14 = arith.maximumf %12, %13 : vector<8x32xf32>
    %c0_12 = arith.constant 0 : index
    %c0_13 = arith.constant 0 : index
    %15 = vector.load %arg6[%c0_12, %c0_13] : memref<32x8xf32, #tpu.memory_space<vmem>>, vector<32x8xf32>
    %cst_14 = arith.constant dense<0.000000e+00> : vector<8x8xf32>
    %16 = tpu.matmul %14, %15, %cst_14 {dimension_numbers = #tpu.dot_dimension_numbers<[1], [0], [0], [1], [0, 0, 1, 1], [], []>} : vector<8x32xf32>, vector<32x8xf32>, vector<8x8xf32> -> vector<8x8xf32>
    %c0_15 = arith.constant 0 : index
    %c0_16 = arith.constant 0 : index
    %17 = vector.load %arg7[%c0_15, %c0_16] : memref<1x8xf32, #tpu.memory_space<vmem>>, vector<1x8xf32>
    %18 = vector.broadcast %17 : vector<1x8xf32> to vector<8x8xf32>
    %19 = arith.addf %16, %18 : vector<8x8xf32>
    %c0_17 = arith.constant 0 : index
    %c0_18 = arith.constant 0 : index
    %20 = vector.load %arg8[%c0_17, %c0_18] : memref<8x8xf32, #tpu.memory_space<vmem>>, vector<8x8xf32>
    tpu.vector_store %arg8[%c0_17, %c0_18], %19 {strides = array<i32>} : memref<8x8xf32, #tpu.memory_space<vmem>>, vector<8x8xf32>,
    return
  }
  func.func @transform_0(%arg0: i32) -> (i32, i32) {
    %c0_i32 = arith.constant 0 : i32
    %c0_i32_0 = arith.constant 0 : i32
    return %arg0, %c0_i32 : i32, i32
  }
  func.func @transform_1(%arg0: i32) -> (i32, i32) {
    %c0_i32 = arith.constant 0 : i32
    %c0_i32_0 = arith.constant 0 : i32
    %c0_i32_1 = arith.constant 0 : i32
    return %c0_i32, %c0_i32_0 : i32, i32
  }
  func.func @transform_2(%arg0: i32) -> (i32, i32) {
    %c0_i32 = arith.constant 0 : i32
    %c0_i32_0 = arith.constant 0 : i32
    %c0_i32_1 = arith.constant 0 : i32
    return %c0_i32, %c0_i32_0 : i32, i32
  }
  func.func @transform_3(%arg0: i32) -> (i32, i32) {
    %c0_i32 = arith.constant 0 : i32
    %c0_i32_0 = arith.constant 0 : i32
    %c0_i32_1 = arith.constant 0 : i32
    return %c0_i32, %c0_i32_0 : i32, i32
  }
  func.func @transform_4(%arg0: i32) -> (i32, i32) {
    %c0_i32 = arith.constant 0 : i32
    %c0_i32_0 = arith.constant 0 : i32
    %c0_i32_1 = arith.constant 0 : i32
    return %c0_i32, %c0_i32_0 : i32, i32
  }
  func.func @transform_5(%arg0: i32) -> (i32, i32) {
    %c0_i32 = arith.constant 0 : i32
    %c0_i32_0 = arith.constant 0 : i32
    %c0_i32_1 = arith.constant 0 : i32
    return %c0_i32, %c0_i32_0 : i32, i32
  }
  func.func @transform_6(%arg0: i32) -> (i32, i32) {
    %c0_i32 = arith.constant 0 : i32
    %c0_i32_0 = arith.constant 0 : i32
    %c0_i32_1 = arith.constant 0 : i32
    return %c0_i32, %c0_i32_0 : i32, i32
  }
  func.func @transform_7(%arg0: i32) -> (i32, i32) {
    %c0_i32 = arith.constant 0 : i32
    %c0_i32_0 = arith.constant 0 : i32
    return %arg0, %c0_i32 : i32, i32
  }
}

</mosaic_0001>

<llo_original>
// kernel: tpu_custom_call.1
$region0: #{tpu_custom_call.1}
  #allocation0 [shape = 'u32[]', space=smem, size = 0x4, offset = 0x4, fixed_abs, tag = 'smem constant byte address 0x4 - core index']
  #allocation1 [shape = 'u32[72,128]{1,0:T(1,128)}', space=vmem, size = 0x9000, scoped, tag = 'internal scratch']
  %s0 = inlined_call_operand.vmem [shape: f32[8,16], index: 0, kind: input, shape index: {}]
  %s1 = inlined_call_operand.hbm [shape: f32[16,32], index: 1, kind: input, shape index: {}]
  %s2 = inlined_call_operand.vmem [shape: f32[1,32], index: 2, kind: input, shape index: {}]
  %s3 = inlined_call_operand.vmem [shape: f32[32,32], index: 3, kind: input, shape index: {}]
  %s4 = inlined_call_operand.vmem [shape: f32[1,32], index: 4, kind: input, shape index: {}]
  %s5 = inlined_call_operand.vmem [shape: f32[32,8], index: 5, kind: input, shape index: {}]
  %s6 = inlined_call_operand.vmem [shape: f32[1,8], index: 6, kind: input, shape index: {}]
  %s7 = inlined_call_operand.hbm [shape: f32[8,8], index: 7, kind: output, shape index: {}]
  %s8 = sld [smem:[#allocation0]]
  $region42: #{tpu_custom_call.1} parent=0
    _
  %s10 = ssub.s32 1, %s8
  %s11 = scalar_select 0, %s10, %s8
  $region1: #{tpu_custom_call.1} parent=0
    #allocation2 [shape = 'u8[8192]{0}', space=vmem, size = 0x2000, scoped, tag = 'input window, operand 1, single buffered']
    #allocation3 [shape = 's32[1]{0}', space=sflag, size = 0x4, scoped, tag = 'scoped memory for tpu_custom_call.1']
    #allocation4 [shape = 's32[1]{0}', space=sflag, size = 0x4, scoped, tag = 'scoped memory for tpu_custom_call.1']
    #allocation5 [shape = 'u8[4096]{0}', space=vmem, size = 0x1000, scoped, tag = 'output window, operand 0, single buffered']
    %12 = vsyncpa [#allocation3], 0
    %13 = vsyncpa [#allocation4], 0
    // Predicated region
    $region2: #{tpu_custom_call.1} parent=1 // pred_check
      _
    $region3: #{tpu_custom_call.1} parent=1 // pred_check_branch
      %15 = sbr.rel (0) target = $region5
    $region4: #{tpu_custom_call.1} parent=1 // pred_region
      _
    $region5: #{tpu_custom_call.1} parent=1 // pred_fallthru
      _
    // Predicated region
    $region6: #{tpu_custom_call.1} parent=1 // pred_check
      _
    $region7: #{tpu_custom_call.1} parent=1 // pred_check_branch
      %17 = sbr.rel (0) target = $region9
    $region8: #{tpu_custom_call.1} parent=1 // pred_region
      %19 = vsyncadd [#allocation3], 0
      %s20 = sshll.u32 %s1, 4
      %s21 = int_to_ptr.hbm [resolvable:$true] %s20
      %s22 = sshll.u32 [#allocation2], 4
      %s23 = int_to_ptr.vmem [resolvable:$true] %s22
      %28 = dma.hbm_to_vmem [thread:$0]  %s21, 256, %s23, [#allocation3], 128, 128, 8
    $region9: #{tpu_custom_call.1} parent=1 // pred_fallthru
      _
    // Predicated region
    $region10: #{tpu_custom_call.1} parent=1 // pred_check
      _
    $region11: #{tpu_custom_call.1} parent=1 // pred_check_branch
      %30 = sbr.rel (0) target = $region13
    $region12: #{tpu_custom_call.1} parent=1 // pred_region
      _
    $region13: #{tpu_custom_call.1} parent=1 // pred_fallthru
      _
    // Predicated region
    $region14: #{tpu_custom_call.1} parent=1 // pred_check
      _
    $region15: #{tpu_custom_call.1} parent=1 // pred_check_branch
      %32 = sbr.rel (0) target = $region17
    $region16: #{tpu_custom_call.1} parent=1 // pred_region
      _
    $region17: #{tpu_custom_call.1} parent=1 // pred_fallthru
      _
    // Predicated region
    $region18: #{tpu_custom_call.1} parent=1 // pred_check
      _
    $region19: #{tpu_custom_call.1} parent=1 // pred_check_branch
      %34 = sbr.rel (0) target = $region21
    $region20: #{tpu_custom_call.1} parent=1 // pred_region
      _
    $region21: #{tpu_custom_call.1} parent=1 // pred_fallthru
      _
    // Predicated region
    $region22: #{tpu_custom_call.1} parent=1 // pred_check
      _
    $region23: #{tpu_custom_call.1} parent=1 // pred_check_branch
      %36 = sbr.rel (0) target = $region25
    $region24: #{tpu_custom_call.1} parent=1 // pred_region
      _
    $region25: #{tpu_custom_call.1} parent=1 // pred_fallthru
      _
    // Predicated region
    $region26: #{tpu_custom_call.1} parent=1 // pred_check
      _
    $region27: #{tpu_custom_call.1} parent=1 // pred_check_branch
      %38 = sbr.rel (0) target = $region29
    $region28: #{tpu_custom_call.1} parent=1 // pred_region
      _
    $region29: #{tpu_custom_call.1} parent=1 // pred_fallthru
      _
    // Predicated region
    $region30: #{tpu_custom_call.1} parent=1 // pred_check
      _
    $region31: #{tpu_custom_call.1} parent=1 // pred_check_branch
      %40 = sbr.rel (0) target = $region33
    $region32: #{tpu_custom_call.1} parent=1 // pred_region
      %42 = dma.done [#allocation3], 256
    $region33: #{tpu_custom_call.1} parent=1 // pred_fallthru
      _
    %v43 = vld [vmem:[%s0] sm:$0xff]
    %v44 = vld [vmem:[#allocation2] sm:$0xff]
    %v45 = vld [vmem:[#allocation2 + $0x8] sm:$0xff]
    %v46 = vld [vmem:[%s2] sm:$0x1]
    %v48 = vperm.slane %v46, 0
    %vm50 = vcmask 130048
    %v52 = vsel %vm50, %v43, 0
    %54 = vmatpush.msra.mxu0 0.0
    %55 = vmatpush.msra.mxu0 0.0
    %56 = vmatpush.msra.mxu0 0.0
    %57 = vmatpush.msra.mxu0 0.0
    %58 = vmatpush.msra.mxu0 0.0
    %59 = vmatpush.msra.mxu0 0.0
    %60 = vmatpush.msra.mxu0 0.0
    %61 = vmatpush.msra.mxu0 0.0
    %62 = vmatpush.msra.mxu0 0.0
    %63 = vmatpush.msra.mxu0 0.0
    %64 = vmatpush.msra.mxu0 0.0
    %65 = vmatpush.msra.mxu0 0.0
    %66 = vmatpush.msra.mxu0 0.0
    %67 = vmatpush.msra.mxu0 0.0
    %68 = vmatpush.msra.mxu0 %v45
    %69 = vmatpush.msra.mxu0 %v44
    %70 = vmatmul.f32.gmra.mxu0 %v52
    %v71 = vpop.f32.mrf.mxu0
    %v72 = vadd.f32 %v48, %v71
    %73 = vdwg.mxu0
    %v74 = vmax.f32 %v72, 0.0
    %v75 = vld [vmem:[%s3] sm:$0xff]
    %v76 = vld [vmem:[%s3 + $0x8] sm:$0xff]
    %v77 = vld [vmem:[%s3 + $0x10] sm:$0xff]
    %v78 = vld [vmem:[%s3 + $0x18] sm:$0xff]
    %v79 = vld [vmem:[%s4] sm:$0x1]
    %v81 = vperm.slane %v79, 0
    %vm83 = vcmask 261120
    %v85 = vsel %vm83, %v74, 0
    %87 = vmatpush.msra.mxu0 0.0
    %88 = vmatpush.msra.mxu0 0.0
    %89 = vmatpush.msra.mxu0 0.0
    %90 = vmatpush.msra.mxu0 0.0
    %91 = vmatpush.msra.mxu0 0.0
    %92 = vmatpush.msra.mxu0 0.0
    %93 = vmatpush.msra.mxu0 0.0
    %94 = vmatpush.msra.mxu0 0.0
    %95 = vmatpush.msra.mxu0 0.0
    %96 = vmatpush.msra.mxu0 0.0
    %97 = vmatpush.msra.mxu0 0.0
    %98 = vmatpush.msra.mxu0 0.0
    %99 = vmatpush.msra.mxu0 %v78
    %100 = vmatpush.msra.mxu0 %v77
    %101 = vmatpush.msra.mxu0 %v76
    %102 = vmatpush.msra.mxu0 %v75
    %103 = vmatmul.f32.gmra.mxu0 %v85
    %v104 = vpop.f32.mrf.mxu0
    %v105 = vadd.f32 %v81, %v104
    %106 = vdwg.mxu0
    %v107 = vmax.f32 %v105, 0.0
    %v108 = vld [vmem:[%s5] sm:$0xff]
    %v109 = vld [vmem:[%s5 + $0x8] sm:$0xff]
    %v110 = vld [vmem:[%s5 + $0x10] sm:$0xff]
    %v111 = vld [vmem:[%s5 + $0x18] sm:$0xff]
    %v112 = vld [vmem:[%s6] sm:$0x1]
    %v114 = vperm.slane %v112, 0
    %v117 = vsel %vm83, %v107, 0
    %119 = vmatpush.msra.mxu0 0.0
    %120 = vmatpush.msra.mxu0 0.0
    %121 = vmatpush.msra.mxu0 0.0
    %122 = vmatpush.msra.mxu0 0.0
    %123 = vmatpush.msra.mxu0 0.0
    %124 = vmatpush.msra.mxu0 0.0
    %125 = vmatpush.msra.mxu0 0.0
    %126 = vmatpush.msra.mxu0 0.0
    %127 = vmatpush.msra.mxu0 0.0
    %128 = vmatpush.msra.mxu0 0.0
    %129 = vmatpush.msra.mxu0 0.0
    %130 = vmatpush.msra.mxu0 0.0
    %131 = vmatpush.msra.mxu0 %v111
    %132 = vmatpush.msra.mxu0 %v110
    %133 = vmatpush.msra.mxu0 %v109
    %134 = vmatpush.msra.mxu0 %v108
    %135 = vmatmul.f32.gmra.mxu0 %v117
    %v136 = vpop.f32.mrf.mxu0
    %v137 = vadd.f32 %v114, %v136
    %138 = vdwg.mxu0
    %vm139 = vcmask 64512
    %140 = vst.msk [vmem:[#allocation5] sm:$0xff] %vm139, %v137
    // Predicated region
    $region34: #{tpu_custom_call.1} parent=1 // pred_check
      _
    $region35: #{tpu_custom_call.1} parent=1 // pred_check_branch
      %142 = sbr.rel (0) target = $region37
    $region36: #{tpu_custom_call.1} parent=1 // pred_region
      %144 = vsyncadd [#allocation4], 0
      %s146 = sshll.u32 [#allocation5], 4
      %s147 = int_to_ptr.vmem [resolvable:$true] %s146
      %s148 = sshll.u32 %s7, 4
      %s149 = int_to_ptr.hbm [resolvable:$true] %s148
      %151 = dma.vmem_to_hbm [thread:$0]  %s147, 128, %s149, [#allocation4]
    $region37: #{tpu_custom_call.1} parent=1 // pred_fallthru
      _
    // Predicated region
    $region38: #{tpu_custom_call.1} parent=1 // pred_check
      _
    $region39: #{tpu_custom_call.1} parent=1 // pred_check_branch
      %153 = sbr.rel (0) target = $region41
    $region40: #{tpu_custom_call.1} parent=1 // pred_region
      %155 = dma.done [#allocation4], 128
    $region41: #{tpu_custom_call.1} parent=1 // pred_fallthru
      _
    %156 = vsyncpa [#allocation3], 1
    %157 = vsyncpa [#allocation4], 1

</llo_original>
